<compile_context>
chip_gen: v7x
topology: tpu7x:2x2x1
jax: 0.10.0
libtpu: 0.0.40
codegen_flags: <defaults>
</compile_context>

<pallas_src>
import functools

import jax
import jax.numpy as jnp
import numpy as np
from jax.experimental import pallas as pl
from jax.experimental.pallas import tpu as pltpu


def _loss_tile_kernel(h_ref, ht_ref, s_ref, o_ref, *, batch_size, n_total, tile_m):
    """One (TM, N) row slab of the similarity matrix -> partial loss sum."""
    i = pl.program_id(0)
    row0 = i * tile_m

    h_tile = h_ref[...]              # (TM, D)  f32, streamed row tile of h
    ht = ht_ref[...]                 # (D, N)   f32, (h / temperature).T (resident)
    s_tile = s_ref[...]              # (TM, B)  f32, row slice of S (rows mod B)

    # sim rows for this tile; temperature already folded into the RHS.
    sim = jnp.dot(h_tile, ht, preferred_element_type=jnp.float32)       # (TM, N)

    # S_2 = 1 - tile(S, (2, 2)) restricted to this row tile: column index is
    # taken modulo B, i.e. two lane-wise copies of the (TM, B) slice.
    s2 = 1.0 - jnp.concatenate([s_tile, s_tile], axis=1)                # (TM, N)
    sim1 = sim * s2

    row = row0 + jax.lax.broadcasted_iota(jnp.int32, (tile_m, n_total), 0)
    col = jax.lax.broadcasted_iota(jnp.int32, (tile_m, n_total), 1)
    pos_col = jax.lax.rem(row + batch_size, jnp.int32(n_total))
    is_pos = col == pos_col
    exclude = jnp.logical_or(col == row, is_pos)

    # positive sample per row comes from `sim` (not `sim1`)
    pos = jnp.sum(jnp.where(is_pos, sim, 0.0), axis=1, keepdims=True)   # (TM, 1)

    # masked negatives reused for both the running max and the exp-sum
    # (exp(-inf - m) == 0, and m is finite because it includes pos).
    neg = jnp.where(exclude, -jnp.inf, sim1)                            # (TM, N)
    m = jnp.maximum(jnp.max(neg, axis=1, keepdims=True), pos)           # (TM, 1)
    sum_exp = jnp.sum(jnp.exp(neg - m), axis=1, keepdims=True) + jnp.exp(pos - m)
    lse = m + jnp.log(sum_exp)                                          # (TM, 1)

    # partial CE(reduction='sum') contribution of this row tile, written as a
    # lane-dense block; final reduction + 1/N happens in the wrapper.
    partial = jnp.sum(lse - pos, axis=(0, 1), keepdims=True)            # (1, 1)
    o_ref[...] = jnp.broadcast_to(partial.reshape(1, 1, 1), o_ref.shape)


def _pick_tile_m(batch_size):
    for t in (512, 256, 128, 64, 32, 16, 8):
        if batch_size % t == 0:
            return t
    return None


def contrastive_loss(h_i, h_j, S, temperature_f=0.05, tile_m=None):
    """JAX wrapper: cheap glue (concat, transpose, scale) outside; hot path in Pallas."""
    B, D = h_i.shape
    N = 2 * B

    if tile_m is None:
        tile_m = _pick_tile_m(B)
    # TODO(synk): pad rows to a multiple of 8 (and mask them out of the exp-sum
    # and the final loss sum) to support batch sizes that are not multiples of 8.
    assert tile_m is not None and B % tile_m == 0, (
        "batch_size must be a multiple of 8 for the Pallas path")
    num_tiles = N // tile_m
    nb = B // tile_m  # number of row blocks of S per half of h

    h = jnp.concatenate([h_i, h_j], axis=0).astype(jnp.float32)            # (N, D)
    # Pre-transpose once and fold 1/temperature into the resident RHS so the
    # kernel needs neither an XLU transpose nor a (TM, N) scalar multiply.
    ht_scaled = (h.T * (1.0 / float(temperature_f))).astype(jnp.float32)   # (D, N)
    S = S.astype(jnp.float32)                                              # (B, B)

    kernel = functools.partial(
        _loss_tile_kernel, batch_size=B, n_total=N, tile_m=tile_m)

    # VMEM budget: double-buffered streamed tiles + resident hT + in-kernel
    # temporaries. Only raise the scoped limit when actually needed (keeps
    # v7x's 64 MiB physical VMEM safe for the small default case).
    vmem_est = 4 * (2 * tile_m * D + D * N + 2 * tile_m * B
                    + 2 * 8 * 128 + 6 * tile_m * N)
    cp = dict(dimension_semantics=("parallel",))
    if vmem_est > 32 * 1024 * 1024:
        cp["vmem_limit_bytes"] = min(int(vmem_est * 5 // 4), 100 * 1024 * 1024)

    partials = pl.pallas_call(
        kernel,
        out_shape=jax.ShapeDtypeStruct((num_tiles, 8, 128), jnp.float32),
        grid_spec=pltpu.PrefetchScalarGridSpec(
            num_scalar_prefetch=0,
            grid=(num_tiles,),
            in_specs=[
                pl.BlockSpec((tile_m, D), lambda i: (i, 0)),               # h row tiles
                pl.BlockSpec((D, N), lambda i: (0, 0)),                    # hT resident
                pl.BlockSpec((tile_m, B), lambda i, nb=nb: (i % nb, 0)),   # S row slice
            ],
            out_specs=pl.BlockSpec((1, 8, 128), lambda i: (i, 0, 0)),
        ),
        compiler_params=pltpu.CompilerParams(**cp),
    )(h, ht_scaled, S)

    return jnp.sum(partials[:, 0, 0]) / N


def reference_loss(h_i, h_j, S, temperature_f=0.05):
    """Pure-JAX/NumPy replication of the PyTorch forward (for verification)."""
    B = h_i.shape[0]
    N = 2 * B
    h = jnp.concatenate([h_i, h_j], axis=0)
    sim = (h @ h.T) / temperature_f
    sim1 = sim * (1.0 - jnp.tile(S, (2, 2)))
    pos = jnp.concatenate([jnp.diagonal(sim, offset=B),
                           jnp.diagonal(sim, offset=-B)]).reshape(N, 1)
    mask = np.ones((N, N), dtype=bool)
    np.fill_diagonal(mask, False)
    for i in range(B):
        mask[i, B + i] = False
        mask[B + i, i] = False
    neg = jnp.asarray(sim1)[mask].reshape(N, N - 2)
    logits = jnp.concatenate([pos, neg], axis=1)
    lse = jax.scipy.special.logsumexp(logits, axis=1)
    return jnp.sum(lse - logits[:, 0]) / N


if __name__ == "__main__":
    key = jax.random.PRNGKey(0)
    k1, k2, k3 = jax.random.split(key, 3)

    B, D = 8, 32                       # batch=8 samples per view, hidden=32
    h_i = jax.random.normal(k1, (B, D), dtype=jnp.float32)
    h_j = jax.random.normal(k2, (B, D), dtype=jnp.float32)
    S = jax.random.uniform(k3, (B, B), dtype=jnp.float32)

    loss = contrastive_loss(h_i, h_j, S, temperature_f=0.05)
    loss = jax.block_until_ready(loss)

    ref = jax.block_until_ready(reference_loss(h_i, h_j, S, temperature_f=0.05))
    assert np.allclose(np.asarray(loss), np.asarray(ref), rtol=1e-4, atol=1e-4), (
        loss, ref)

    print("KERNEL_OK")
</pallas_src>

<mosaic_0001>
module attributes {stable_mosaic.version = 11 : i64} {
  func.func @_loss_tile_kernel(%arg0: i32, %arg1: memref<8x32xf32, #tpu.memory_space<vmem>>, %arg2: memref<32x16xf32, #tpu.memory_space<vmem>>, %arg3: memref<8x8xf32, #tpu.memory_space<vmem>>, %arg4: memref<1x8x128xf32, #tpu.memory_space<vmem>>) attributes {dimension_semantics = [#tpu.dimension_semantics<parallel>], iteration_bounds = array<i64: 2>, scalar_prefetch = 0 : i64, scratch_operands = 0 : i64, tpu.core_type = #tpu.core_type<tc>, window_params = [{transform_indices = @transform_0, window_bounds = array<i64: 8, 32>}, {pipeline_mode = #tpu.pipeline_mode<synchronous>, transform_indices = @transform_1, window_bounds = array<i64: 32, 16>}, {transform_indices = @transform_2, window_bounds = array<i64: 8, 8>}, {transform_indices = @transform_3, window_bounds = array<i64: 1, 8, 128>}]} {
    %c8_i32 = arith.constant 8 : i32
    %0 = arith.muli %arg0, %c8_i32 : i32
    %c0 = arith.constant 0 : index
    %c0_0 = arith.constant 0 : index
    %1 = vector.load %arg1[%c0, %c0_0] : memref<8x32xf32, #tpu.memory_space<vmem>>, vector<8x32xf32>
    %c0_1 = arith.constant 0 : index
    %c0_2 = arith.constant 0 : index
    %2 = vector.load %arg2[%c0_1, %c0_2] : memref<32x16xf32, #tpu.memory_space<vmem>>, vector<32x16xf32>
    %c0_3 = arith.constant 0 : index
    %c0_4 = arith.constant 0 : index
    %3 = vector.load %arg3[%c0_3, %c0_4] : memref<8x8xf32, #tpu.memory_space<vmem>>, vector<8x8xf32>
    %cst = arith.constant dense<0.000000e+00> : vector<8x16xf32>
    %4 = tpu.matmul %1, %2, %cst {dimension_numbers = #tpu.dot_dimension_numbers<[1], [0], [0], [1], [0, 0, 1, 1], [], []>} : vector<8x32xf32>, vector<32x16xf32>, vector<8x16xf32> -> vector<8x16xf32>
    %5 = tpu.concatenate %3, %3 in 1 : vector<8x8xf32>, vector<8x8xf32> -> vector<8x16xf32>
    %cst_5 = arith.constant 1.000000e+00 : f32
    %6 = vector.broadcast %cst_5 : f32 to vector<8x16xf32>
    %7 = arith.subf %6, %5 : vector<8x16xf32>
    %8 = arith.mulf %4, %7 : vector<8x16xf32>
    %9 = tpu.iota {dimensions = array<i32: 0>} : vector<8x16xi32>
    %10 = vector.broadcast %0 : i32 to vector<8x16xi32>
    %11 = arith.addi %10, %9 : vector<8x16xi32>
    %12 = tpu.iota {dimensions = array<i32: 1>} : vector<8x16xi32>
    %c8_i32_6 = arith.constant 8 : i32
    %13 = vector.broadcast %c8_i32_6 : i32 to vector<8x16xi32>
    %14 = arith.addi %11, %13 : vector<8x16xi32>
    %c16_i32 = arith.constant 16 : i32
    %15 = vector.broadcast %c16_i32 : i32 to vector<8x16xi32>
    %16 = arith.remsi %14, %15 : vector<8x16xi32>
    %17 = arith.cmpi eq, %12, %16 : vector<8x16xi32>
    %18 = arith.cmpi eq, %12, %11 : vector<8x16xi32>
    %19 = arith.ori %18, %17 : vector<8x16xi1>
    %cst_7 = arith.constant 0.000000e+00 : f32
    %20 = vector.broadcast %cst_7 : f32 to vector<8x16xf32>
    %21 = arith.select %17, %4, %20 : vector<8x16xi1>, vector<8x16xf32>
    %cst_8 = arith.constant dense<0.000000e+00> : vector<8xf32>
    %22 = vector.multi_reduction <add>, %21, %cst_8 [1] : vector<8x16xf32> to vector<8xf32>
    %23 = vector.shape_cast %22 : vector<8xf32> to vector<8x1xf32>
    %cst_9 = arith.constant 0xFF800000 : f32
    %24 = vector.broadcast %cst_9 : f32 to vector<8x16xf32>
    %25 = arith.select %19, %24, %8 : vector<8x16xi1>, vector<8x16xf32>
    %cst_10 = arith.constant dense<0xFF800000> : vector<8xf32>
    %26 = vector.multi_reduction <maximumf>, %25, %cst_10 [1] : vector<8x16xf32> to vector<8xf32>
    %27 = vector.shape_cast %26 : vector<8xf32> to vector<8x1xf32>
    %28 = arith.maximumf %27, %23 : vector<8x1xf32>
    %29 = vector.broadcast %28 : vector<8x1xf32> to vector<8x16xf32>
    %30 = arith.subf %25, %29 : vector<8x16xf32>
    %31 = math.exp %30 : vector<8x16xf32>
    %cst_11 = arith.constant dense<0.000000e+00> : vector<8xf32>
    %32 = vector.multi_reduction <add>, %31, %cst_11 [1] : vector<8x16xf32> to vector<8xf32>
    %33 = vector.shape_cast %32 : vector<8xf32> to vector<8x1xf32>
    %34 = arith.subf %23, %28 : vector<8x1xf32>
    %35 = math.exp %34 : vector<8x1xf32>
    %36 = arith.addf %33, %35 : vector<8x1xf32>
    %37 = math.log %36 : vector<8x1xf32>
    %38 = arith.addf %28, %37 : vector<8x1xf32>
    %39 = arith.subf %38, %23 : vector<8x1xf32>
    %40 = vector.shape_cast %39 : vector<8x1xf32> to vector<1x8x1xf32>
    %cst_12 = arith.constant dense<0.000000e+00> : vector<1xf32>
    %41 = vector.multi_reduction <add>, %40, %cst_12 [1, 2] : vector<1x8x1xf32> to vector<1xf32>
    %42 = vector.shape_cast %41 : vector<1xf32> to vector<1x1x1xf32>
    %43 = vector.extract %42[0, 0, 0] : f32 from vector<1x1x1xf32>
    %44 = vector.broadcast %43 : f32 to vector<1x1xf32>
    %45 = vector.shape_cast %44 : vector<1x1xf32> to vector<1x1x1xf32>
    %46 = vector.shape_cast %45 : vector<1x1x1xf32> to vector<1x1x1xf32>
    %47 = vector.broadcast %46 : vector<1x1x1xf32> to vector<1x8x128xf32>
    %c0_13 = arith.constant 0 : index
    %c0_14 = arith.constant 0 : index
    %c0_15 = arith.constant 0 : index
    %48 = vector.load %arg4[%c0_13, %c0_14, %c0_15] : memref<1x8x128xf32, #tpu.memory_space<vmem>>, vector<1x8x128xf32>
    tpu.vector_store %arg4[%c0_13, %c0_14, %c0_15], %47 {strides = array<i32>} : memref<1x8x128xf32, #tpu.memory_space<vmem>>, vector<1x8x128xf32>,
    return
  }
  func.func @transform_0(%arg0: i32) -> (i32, i32) {
    %c0_i32 = arith.constant 0 : i32
    %c0_i32_0 = arith.constant 0 : i32
    return %arg0, %c0_i32 : i32, i32
  }
  func.func @transform_1(%arg0: i32) -> (i32, i32) {
    %c0_i32 = arith.constant 0 : i32
    %c0_i32_0 = arith.constant 0 : i32
    %c0_i32_1 = arith.constant 0 : i32
    return %c0_i32, %c0_i32_0 : i32, i32
  }
  func.func @transform_2(%arg0: i32) -> (i32, i32) {
    %c1_i32 = arith.constant 1 : i32
    %c0_i32 = arith.constant 0 : i32
    %0 = arith.cmpi eq, %c1_i32, %c0_i32 : i32
    %c1_i32_0 = arith.constant 1 : i32
    %1 = arith.select %0, %c1_i32_0, %c1_i32 : i32
    %2 = arith.remsi %arg0, %1 : i32
    %c0_i32_1 = arith.constant 0 : i32
    %3 = arith.cmpi ne, %2, %c0_i32_1 : i32
    %c0_i32_2 = arith.constant 0 : i32
    %4 = arith.cmpi slt, %2, %c0_i32_2 : i32
    %c0_i32_3 = arith.constant 0 : i32
    %5 = arith.cmpi slt, %1, %c0_i32_3 : i32
    %6 = arith.xori %4, %5 : i1
    %7 = arith.andi %6, %3 : i1
    %8 = arith.addi %2, %1 : i32
    %9 = arith.select %7, %8, %2 : i32
    %c0_i32_4 = arith.constant 0 : i32
    %c0_i32_5 = arith.constant 0 : i32
    return %9, %c0_i32_4 : i32, i32
  }
  func.func @transform_3(%arg0: i32) -> (i32, i32, i32) {
    %c0_i32 = arith.constant 0 : i32
    %c0_i32_0 = arith.constant 0 : i32
    %c0_i32_1 = arith.constant 0 : i32
    return %arg0, %c0_i32, %c0_i32_0 : i32, i32, i32
  }
}

</mosaic_0001>

<llo_original>
// kernel: tpu_custom_call.1
$region0: #{tpu_custom_call.1}
  #allocation0 [shape = 'u32[]', space=smem, size = 0x4, offset = 0x4, fixed_abs, tag = 'smem constant byte address 0x4 - core index']
  #allocation1 [shape = 'u32[144,128]{1,0:T(1,128)}', space=vmem, size = 0x12000, scoped, tag = 'internal scratch']
  %s0 = inlined_call_operand.vmem [shape: f32[16,32], index: 0, kind: input, shape index: {}]
  %s1 = inlined_call_operand.vmem [shape: f32[32,16], index: 1, kind: input, shape index: {}]
  %s2 = inlined_call_operand.vmem [shape: f32[8,8], index: 2, kind: input, shape index: {}]
  %s3 = inlined_call_operand.hbm [shape: f32[2,8,128], index: 3, kind: output, shape index: {}]
  %s4 = sld [smem:[#allocation0]]
  $region45: #{tpu_custom_call.1} parent=0
    _
  %s6 = ssub.s32 1, %s4
  %s7 = scalar_select 0, %s6, %s4
  $region1: #{tpu_custom_call.1} parent=0
    #allocation2 [shape = 'u8[8192]{0}', space=vmem, size = 0x2000, scoped, tag = 'output window, operand 0']
    #allocation3 [shape = 's32[2]{0}', space=sflag, size = 0x8, scoped, tag = 'scoped memory for tpu_custom_call.1']
    %8 = vsyncpa [#allocation3], 0
    %s9 = scalar_lea.sflag [#allocation3], 1
    %10 = vsyncpa %s9, 0
    loop: start=0, step=1, limit=4
    $region2: #{tpu_custom_call.1} parent=1 // loop_pre_header
      _
    $region3: #{tpu_custom_call.1} parent=1 // loop_header
      %s12 = sphi 0, %s16
      %p13 = scmp.ge.s32.totalorder %s12, 4
      %s22 = sphi 0, %s24
      %s25 = sphi 0, %s22
      %s26 = sphi 0, %s25
      %s42 = sphi 0, %s26
      %s46 = sphi 0, %s46
      %s48 = sphi 0, %s46
      %s49 = sphi 0, %s48
      %s63 = sphi 0, %s49
      %s67 = sphi 0, %s67
      %s69 = sphi 0, %s67
      %s70 = sphi 0, %s69
      %s84 = sphi 0, %s70
      %s90 = sphi 0, %s92
      %s93 = sphi 0, %s90
      %s94 = sphi 0, %s93
      %s110 = sphi 0, %s94
    $region4: #{tpu_custom_call.1} parent=1 // loop_header_branch
      %15 = sbr.rel (%p13) target = $region8
    $region5: #{tpu_custom_call.1} parent=1 // loop_body
      %s17 = ssub.s32 %s12, 1
      %s18 = ssub.s32 %s12, 2
      %s19 = sadd.s32 %s12, 1
      %s20 = ssub.s32 %s12, %s19
      %p21 = scmp.eq.s32.totalorder %s20, 0
      %s23 = sadd.s32 %s22, 1
      %s24 = scalar_select %p21, %s22, %s23
      %p27 = pneg %p21
      %p28 = scmp.eq.s32.totalorder %s12, 1
      %p29 = por %p27, %p28
      %p30 = scmp.ne.s32.totalorder %s22, %s25
      %p31 = scmp.eq.s32.totalorder %s12, 0
      %p32 = por %p30, %p31
      %p33 = scmp.ne.s32.totalorder %s22, %s25
      %p34 = scmp.eq.s32.totalorder %s17, 1
      %p35 = por %p33, %p34
      %p36 = scmp.ne.s32.totalorder %s25, %s26
      %p37 = scmp.eq.s32.totalorder %s17, 0
      %p38 = por %p36, %p37
      %p39 = scmp.ne.s32.totalorder %s25, %s26
      %p40 = scmp.eq.s32.totalorder %s18, 1
      %p41 = por %p39, %p40
      %p43 = scmp.ne.s32.totalorder %s26, %s42
      %p44 = scmp.eq.s32.totalorder %s18, 0
      %p45 = por %p43, %p44
      %s47 = sadd.s32 %s46, 1
      %p50 = scmp.eq.s32.totalorder %s12, 1
      %p51 = scmp.ne.s32.totalorder %s46, %s48
      %p52 = scmp.eq.s32.totalorder %s12, 0
      %p53 = por %p51, %p52
      %p54 = scmp.ne.s32.totalorder %s46, %s48
      %p55 = scmp.eq.s32.totalorder %s17, 1
      %p56 = por %p54, %p55
      %p57 = scmp.ne.s32.totalorder %s48, %s49
      %p58 = scmp.eq.s32.totalorder %s17, 0
      %p59 = por %p57, %p58
      %p60 = scmp.ne.s32.totalorder %s48, %s49
      %p61 = scmp.eq.s32.totalorder %s18, 1
      %p62 = por %p60, %p61
      %p64 = scmp.ne.s32.totalorder %s49, %s63
      %p65 = scmp.eq.s32.totalorder %s18, 0
      %p66 = por %p64, %p65
      %s68 = sadd.s32 %s67, 1
      %p71 = scmp.eq.s32.totalorder %s12, 1
      %p72 = scmp.ne.s32.totalorder %s67, %s69
      %p73 = scmp.eq.s32.totalorder %s12, 0
      %p74 = por %p72, %p73
      %p75 = scmp.ne.s32.totalorder %s67, %s69
      %p76 = scmp.eq.s32.totalorder %s17, 1
      %p77 = por %p75, %p76
      %p78 = scmp.ne.s32.totalorder %s69, %s70
      %p79 = scmp.eq.s32.totalorder %s17, 0
      %p80 = por %p78, %p79
      %p81 = scmp.ne.s32.totalorder %s69, %s70
      %p82 = scmp.eq.s32.totalorder %s18, 1
      %p83 = por %p81, %p82
      %p85 = scmp.ne.s32.totalorder %s70, %s84
      %p86 = scmp.eq.s32.totalorder %s18, 0
      %p87 = por %p85, %p86
      %s88 = ssub.s32 %s12, %s19
      %p89 = scmp.eq.s32.totalorder %s88, 0
      %s91 = sadd.s32 %s90, 1
      %s92 = scalar_select %p89, %s90, %s91
      %p95 = pneg %p89
      %p96 = scmp.eq.s32.totalorder %s12, 1
      %p97 = por %p95, %p96
      %p98 = scmp.ne.s32.totalorder %s90, %s93
      %p99 = scmp.eq.s32.totalorder %s12, 0
      %p100 = por %p98, %p99
      %p101 = scmp.ne.s32.totalorder %s90, %s93
      %p102 = scmp.eq.s32.totalorder %s17, 1
      %p103 = por %p101, %p102
      %p104 = scmp.ne.s32.totalorder %s93, %s94
      %p105 = scmp.eq.s32.totalorder %s17, 0
      %p106 = por %p104, %p105
      %p107 = scmp.ne.s32.totalorder %s93, %s94
      %p108 = scmp.eq.s32.totalorder %s18, 1
      %p109 = por %p107, %p108
      %p111 = scmp.ne.s32.totalorder %s94, %s110
      %p112 = scmp.eq.s32.totalorder %s18, 0
      %p113 = por %p111, %p112
      %p114 = scmp.le.s32.totalorder 1, %s12
      %p115 = scmp.lt.s32.totalorder %s12, 3
      %p116 = pnand %p114, %p115
      %p117 = pneg %p116
      // Predicated region
      $region9: #{tpu_custom_call.1} parent=5 // pred_check
        _
      $region10: #{tpu_custom_call.1} parent=5 // pred_check_branch
        %119 = sbr.rel (%p116) target = $region12
      $region11: #{tpu_custom_call.1} parent=5 // pred_region
        %s120 = ssub.s32 %s12, 1
        // Predicated region
        $region13: #{tpu_custom_call.1} parent=11 // pred_check
          %p121 = pneg %p59
        $region14: #{tpu_custom_call.1} parent=11 // pred_check_branch
          %123 = sbr.rel (%p121) target = $region16
        $region15: #{tpu_custom_call.1} parent=11 // pred_region
          _
        $region16: #{tpu_custom_call.1} parent=11 // pred_fallthru
          _
        // Predicated region
        $region17: #{tpu_custom_call.1} parent=11 // pred_check
          %p124 = pneg %p80
        $region18: #{tpu_custom_call.1} parent=11 // pred_check_branch
          %126 = sbr.rel (%p124) target = $region20
        $region19: #{tpu_custom_call.1} parent=11 // pred_region
          _
        $region20: #{tpu_custom_call.1} parent=11 // pred_fallthru
          _
      $region12: #{tpu_custom_call.1} parent=5 // pred_fallthru
        _
      %p127 = scmp.lt.s32.totalorder %s12, 2
      // Predicated region
      $region21: #{tpu_custom_call.1} parent=5 // pred_check
        %p128 = pneg %p127
      $region22: #{tpu_custom_call.1} parent=5 // pred_check_branch
        %130 = sbr.rel (%p128) target = $region24
      $region23: #{tpu_custom_call.1} parent=5 // pred_region
        // Predicated region
        $region25: #{tpu_custom_call.1} parent=23 // pred_check
          %p131 = pneg %p32
        $region26: #{tpu_custom_call.1} parent=23 // pred_check_branch
          %133 = sbr.rel (%p131) target = $region28
        $region27: #{tpu_custom_call.1} parent=23 // pred_region
          %p134 = scmp.lt.s32.totalorder %s12, 1
          %s135 = scalar_select %p134, %s12, 1
          %s136 = smul.addr %s135, 8
          %s137 = scalar_lea.vmem %s0, %s136
        $region28: #{tpu_custom_call.1} parent=23 // pred_fallthru
          _
      $region24: #{tpu_custom_call.1} parent=5 // pred_fallthru
        _
      %p138 = scmp.le.s32.totalorder 1, %s12
      %p139 = scmp.lt.s32.totalorder %s12, 3
      %p140 = pnand %p138, %p139
      %p141 = pneg %p140
      // Predicated region
      $region29: #{tpu_custom_call.1} parent=5 // pred_check
        _
      $region30: #{tpu_custom_call.1} parent=5 // pred_check_branch
        %143 = sbr.rel (%p140) target = $region32
      $region31: #{tpu_custom_call.1} parent=5 // pred_region
        %s144 = ssub.s32 %s12, 1
        %p145 = scmp.lt.s32.totalorder %s17, 1
        %s146 = scalar_select %p145, %s17, 1
        %s147 = smul.addr %s146, 8
        %s148 = scalar_lea.vmem %s0, %s147
        %p149 = pneg %p38
        %p150 = pneg %p35
        %p151 = pneg %p59
        %p152 = pneg %p56
        %p153 = pneg %p80
        %p154 = pneg %p77
        %p155 = pneg %p106
        %p156 = pneg %p103
        %s157 = sand.u32 %s93, 1
        %s158 = scalar_lea.sflag [#allocation3], %s157
        %s159 = sand.u32 %s93, 1
        %s160 = smul.addr %s159, 8
        %s161 = scalar_lea.vmem [#allocation2], %s160
        %p162 = scmp.lt.s32.totalorder %s17, 1
        %s163 = scalar_select %p162, %s17, 1
        %s164 = smul.addr %s163, 8
        %s165 = scalar_lea.vmem %s0, %s164
        %s166 = smul.u32 %s17, 8
        %v167 = vld [vmem:[%s165] sm:$0xff]
        %v168 = vld [vmem:[%s1] sm:$0xff]
        %v169 = vld [vmem:[%s1 + $0x8] sm:$0xff]
        %v170 = vld [vmem:[%s1 + $0x10] sm:$0xff]
        %v171 = vld [vmem:[%s1 + $0x18] sm:$0xff]
        %v172 = vld [vmem:[%s2] sm:$0xff]
        %vm173 = vcmask 261120
        %v175 = vsel %vm173, %v167, 0
        %177 = vmatprep.subr.mxu0 0.0
        %178 = vmatpush1.msra.mxu0 %v168
        %179 = vmatprep.subr.mxu0 0.0
        %180 = vmatpush1.msra.mxu0 %v169
        %181 = vmatprep.subr.mxu0 0.0
        %182 = vmatpush1.msra.mxu0 %v170
        %183 = vmatprep.subr.mxu0 0.0
        %184 = vmatpush1.msra.mxu0 %v171
        %185 = vmatprep.subr.mxu0 0.0
        %186 = vmatpush1.msra.mxu0 0.0
        %187 = vmatprep.subr.mxu0 0.0
        %188 = vmatpush1.msra.mxu0 0.0
        %189 = vmatprep.subr.mxu0 0.0
        %190 = vmatpush1.msra.mxu0 0.0
        %191 = vmatprep.subr.mxu0 0.0
        %192 = vmatpush1.msra.mxu0 0.0
        %193 = vmatprep.subr.mxu0 0.0
        %194 = vmatpush1.msra.mxu0 0.0
        %195 = vmatprep.subr.mxu0 0.0
        %196 = vmatpush1.msra.mxu0 0.0
        %197 = vmatprep.subr.mxu0 0.0
        %198 = vmatpush1.msra.mxu0 0.0
        %199 = vmatprep.subr.mxu0 0.0
        %200 = vmatpush1.msra.mxu0 0.0
        %201 = vmatprep.subr.mxu0 0.0
        %202 = vmatpush1.msra.mxu0 0.0
        %203 = vmatprep.subr.mxu0 0.0
        %204 = vmatpush1.msra.mxu0 0.0
        %205 = vmatprep.subr.mxu0 0.0
        %206 = vmatpush1.msra.mxu0 0.0
        %207 = vmatprep.subr.mxu0 0.0
        %208 = vmatpush1.msra.mxu0 0.0
        %209 = vmatprep.subr.mxu0 0.0
        %210 = vmatpush1.msra.mxu0 0.0
        %211 = vmatprep.subr.mxu0 0.0
        %212 = vmatpush1.msra.mxu0 0.0
        %213 = vmatprep.subr.mxu0 0.0
        %214 = vmatpush1.msra.mxu0 0.0
        %215 = vmatprep.subr.mxu0 0.0
        %216 = vmatpush1.msra.mxu0 0.0
        %217 = vmatprep.subr.mxu0 0.0
        %218 = vmatpush1.msra.mxu0 0.0
        %219 = vmatprep.subr.mxu0 0.0
        %220 = vmatpush1.msra.mxu0 0.0
        %221 = vmatprep.subr.mxu0 0.0
        %222 = vmatpush1.msra.mxu0 0.0
        %223 = vmatprep.subr.mxu0 0.0
        %224 = vmatpush1.msra.mxu0 0.0
        %225 = vmatprep.subr.mxu0 0.0
        %226 = vmatpush1.msra.mxu0 0.0
        %227 = vmatprep.subr.mxu0 0.0
        %228 = vmatpush1.msra.mxu0 0.0
        %229 = vmatprep.subr.mxu0 0.0
        %230 = vmatpush1.msra.mxu0 0.0
        %231 = vmatprep.subr.mxu0 0.0
        %232 = vmatpush1.msra.mxu0 0.0
        %233 = vmatprep.subr.mxu0 0.0
        %234 = vmatpush1.msra.mxu0 0.0
        %235 = vmatprep.subr.mxu0 0.0
        %236 = vmatpush1.msra.mxu0 0.0
        %237 = vmatprep.subr.mxu0 0.0
        %238 = vmatpush1.msra.mxu0 0.0
        %239 = vmatprep.subr.mxu0 0.0
        %240 = vmatpush1.msra.mxu0 0.0
        %241 = vmatprep.mubr.f32.mxu0 0.0
        %242 = vmatmul.mubr.f32.gmra.mrb[0].mxu0 %v175
        %v243 = vpop.f32.mrb[0].mxu0
        %v244 = vadd.f32 0.0, %v243
        %v245 = vpop.f32.mrb[0].mxu0
        %246 = vdwg.mxu0
        %248 = vrot.lane.b32.xlu0 %v172, 8
        %v249 = vpop.permute.xlu0 %248
        %vm251 = vcmask 64512
        %v252 = vsel %vm251, %v172, %v249
        %v253 = vsub.f32 1.0, %v252
        %v254 = vmul.f32 %v244, %v253
        %v255 = vlaneseq
        %v256 = vshrl.u32 %v255, 7
        %v257 = vstv %s166
        %v258 = vadd.s32 %v257, %v256
        %v259 = vlaneseq
        %v260 = vand.u32 %v259, 127
        %v261 = vadd.s32 %v258, 8
        %vm262 = vcmp.lt.s32.totalorder %v261, 0
        %v263 = vsub.s32 0, %v261
        %v264 = vsel %vm262, %v263, %v261
        %v265 = vshrl.u32 %v264, 4
        %v266 = vand.u32 %v264, 15
        %v267 = vsub.s32 0, %v266
        %v268 = vsel %vm262, %v267, %v266
        %vm269 = vcmp.eq.s32.totalorder %v260, %v268
        %vm270 = vcmp.eq.s32.totalorder %v260, %v258
        %vm271 = vmor %vm270, %vm269
        %v272 = vsel %vm269, %v244, 0.0
        %vm273 = vcmask 130048
        %v274 = vsel %vm273, %v272, 0.0
        %275 = vadd.xlane.f32.xlu0 %v274
        %v276 = vpop.xlane.xlu0 %275
        %v277 = vsel %vm271, -inf, %v254
        %v278 = vsel %vm273, %v277, -inf
        %279 = vmax.xlane.f32.xlu0 %v278
        %v280 = vpop.xlane.xlu0 %279
        %v281 = vmax.f32 %v280, %v276
        %v282 = vsub.f32 %v277, %v281
        %v283 = vmul.f32 %v282, 1.442695
        %v284 = vpow.pop %v283
        %v285 = vsel %vm273, %v284, 0.0
        %286 = vadd.xlane.f32.xlu0 %v285
        %v287 = vpop.xlane.xlu0 %286
        %v288 = vsub.f32 %v276, %v281
        %v289 = vmul.f32 %v288, 1.442695
        %v290 = vpow.pop %v289
        %v291 = vadd.f32 %v287, %v290
        %v292 = vlog2.pop %v291
        %v293 = vmul.f32 %v292, 0.6931472
        %v294 = vadd.f32 %v281, %v293
        %v295 = vsub.f32 %v294, %v276
        %vm296 = vcmask 7168
        %v297 = vsel %vm296, %v295, 0.0
        %298 = vadd.xlane.f32.xlu0 %v297
        %v299 = vpop.xlane.xlu0 %298
        %v300 = vrot.slane %v299, 4
        %v301 = vadd.f32 %v299, %v300
        %v302 = vrot.slane %v301, 2
        %v303 = vadd.f32 %v301, %v302
        %v304 = vrot.slane %v303, 1
        %v305 = vadd.f32 %v303, %v304
        %s306 = vtos %v305
        %v307 = vstv %s306
        %308 = vst [vmem:[%s161] sm:$0xff] %v307
        %s309 = sand.u32 %s93, 1
        %s310 = scalar_lea.sflag [#allocation3], %s309
        %s311 = sand.u32 %s93, 1
        %s312 = smul.addr %s311, 8
        %s313 = scalar_lea.vmem [#allocation2], %s312
        // Predicated region
        $region33: #{tpu_custom_call.1} parent=31 // pred_check
          %p314 = pneg %p103
        $region34: #{tpu_custom_call.1} parent=31 // pred_check_branch
          %316 = sbr.rel (%p314) target = $region36
        $region35: #{tpu_custom_call.1} parent=31 // pred_region
          %s318 = ssub.s32 128, 128
          %319 = vsyncadd %s310, %s318
          %s320 = smul.addr %s17, 128
          %s321 = scalar_lea.hbm %s3, %s320
          %s323 = sshll.u32 %s313, 4
          %s324 = int_to_ptr.vmem [resolvable:$true] %s323
          %326 = dma.vmem_to_hbm [thread:$0]  %s324, 128, %s321, %s310
        $region36: #{tpu_custom_call.1} parent=31 // pred_fallthru
          _
      $region32: #{tpu_custom_call.1} parent=5 // pred_fallthru
        _
      %p327 = scmp.le.s32.totalorder 2, %s12
      // Predicated region
      $region37: #{tpu_custom_call.1} parent=5 // pred_check
        %p328 = pneg %p327
      $region38: #{tpu_custom_call.1} parent=5 // pred_check_branch
        %330 = sbr.rel (%p328) target = $region40
      $region39: #{tpu_custom_call.1} parent=5 // pred_region
        %s331 = ssub.s32 %s12, 2
        // Predicated region
        $region41: #{tpu_custom_call.1} parent=39 // pred_check
          %p332 = pneg %p109
        $region42: #{tpu_custom_call.1} parent=39 // pred_check_branch
          %334 = sbr.rel (%p332) target = $region44
        $region43: #{tpu_custom_call.1} parent=39 // pred_region
          %s335 = sand.u32 %s94, 1
          %s336 = scalar_lea.sflag [#allocation3], %s335
          %s337 = sand.u32 %s94, 1
          %s338 = smul.addr %s337, 8
          %s339 = scalar_lea.vmem [#allocation2], %s338
          %340 = dma.done %s336, 128
        $region44: #{tpu_custom_call.1} parent=39 // pred_fallthru
          _
      $region40: #{tpu_custom_call.1} parent=5 // pred_fallthru
        _
    $region6: #{tpu_custom_call.1} parent=1 // loop_footer
      %s16 = sadd.s32 1, %s12
    $region7: #{tpu_custom_call.1} parent=1 // loop_footer_branch
      %11 = sbr.rel target = $region3
    $region8: #{tpu_custom_call.1} parent=1 // loop_exit
      _
    %341 = vsyncpa [#allocation3], 1
    %s342 = scalar_lea.sflag [#allocation3], 1
    %343 = vsyncpa %s342, 1

</llo_original>
